<compile_context>
chip_gen: v7x
topology: tpu7x:2x2x1
jax: 0.10.0
libtpu: 0.0.40
codegen_flags: <defaults>
</compile_context>

<pallas_src>
import math
import jax
import jax.numpy as jnp
import numpy as np
from jax import lax
from jax.experimental import pallas as pl
from jax.experimental.pallas import tpu as pltpu

# ----------------------------- config ---------------------------------------
HIDDEN = 32
NUM_HEADS = 4
HEAD_SIZE = HIDDEN // NUM_HEADS          # 8
ALL_HEAD_SIZE = NUM_HEADS * HEAD_SIZE    # 32
BLOCK_SIZE = 2                           # config.block_size_selfattention
CIR = True                               # config.cir_selfattention
BATCH = 2
SEQ = 8
NEG_OFF_BLOCK = -1e9                     # large finite (avoid inf-inf NaNs)


# -------------------- CirMatrix.trans_to_cir (plain JAX glue) ---------------
def trans_to_cir(weight, block_size):
    """Exact JAX port of CirMatrix.trans_to_cir (weight: [out_f, in_f])."""
    out_f, in_f = weight.shape
    q = out_f // block_size
    p = in_f // block_size
    assert out_f % block_size == 0 and in_f % block_size == 0
    tmp = weight.reshape(q, block_size, p, block_size).transpose(0, 2, 1, 3)  # (q,p,bs,bs)
    # wrapped-diagonal means: comp[..., i] = mean_j tmp[..., j, (j+i) % bs]
    comp = jnp.stack(
        [
            jnp.mean(
                jnp.stack(
                    [tmp[:, :, j, (j + i) % block_size] for j in range(block_size)],
                    axis=-1,
                ),
                axis=-1,
            )
            for i in range(block_size)
        ],
        axis=-1,
    )  # (q, p, bs)
    # w[:, :, r, i] = comp[:, :, (r - i) % bs]   (torch.roll(shifts=i, dims=2))
    w = jnp.stack(
        [
            jnp.stack(
                [comp[:, :, (r - i) % block_size] for i in range(block_size)], axis=-1
            )
            for r in range(block_size)
        ],
        axis=-2,
    )  # (q, p, bs, bs)
    w = w.transpose(0, 2, 1, 3).reshape(out_f, in_f)
    return w


# ------------------------------ Pallas kernel -------------------------------
def _attn_kernel(x_ref, mask_ref, w_qkv_ref, o_ref):
    # x_ref:     (B*S, H)              all tokens, flattened over batch
    # mask_ref:  (NH*B*S, NH*B*S)      fused block-diagonal additive mask
    # w_qkv_ref: (H, 3H)               fused, pre-transposed [Wq; Wk; Wv]^T
    # o_ref:     (B*S, H)
    x = x_ref[...]                    # (16, 32)
    w_qkv = w_qkv_ref[...]            # (32, 96)
    mask = mask_ref[...]              # (64, 64)

    # 1) Single fused QKV projection (CirMatrix.forward: x @ W^T, no bias).
    qkv = jnp.dot(x, w_qkv, preferred_element_type=jnp.float32)   # (16, 96)

    # 2) Repack token-major lanes -> head-major sublanes: (B*S, NH*HD) -> (NH*B*S, HD)
    #    Static lane slices + sublane concat only (no reshape/transpose lowering risk).
    def head_stack(col_off):
        return jnp.concatenate(
            [qkv[:, col_off + h * HEAD_SIZE: col_off + (h + 1) * HEAD_SIZE]
             for h in range(NUM_HEADS)],
            axis=0,
        )                                                          # (64, 8)

    q = head_stack(0 * HIDDEN)
    k = head_stack(1 * HIDDEN)
    v = head_stack(2 * HIDDEN)

    # 3) One fused score matmul for all batches & heads (no explicit K transpose).
    scale = 1.0 / math.sqrt(HEAD_SIZE)
    s = lax.dot_general(q, k, (((1,), (1,)), ((), ())),
                        preferred_element_type=jnp.float32) * scale   # (64, 64)
    s = s + mask                       # single VPU add, mask precomputed on host

    # 4) Softmax over all 64 keys; off-block entries are -1e9 -> exp underflows
    #    to exactly 0, so they contribute nothing to max/sum.
    m = jnp.max(s, axis=-1, keepdims=True)
    e = jnp.exp(s - m)
    denom = jnp.sum(e, axis=-1, keepdims=True)
    p = e / denom                      # exact divide (approx recip broke tolerance)

    # 5) One fused PV matmul.
    ctx = jnp.dot(p, v, preferred_element_type=jnp.float32)           # (64, 8)

    # 6) Repack back to token-major (B*S, H) and do one lane-dense store.
    t = BATCH * SEQ
    out = jnp.concatenate(
        [ctx[h * t:(h + 1) * t, :] for h in range(NUM_HEADS)], axis=-1)  # (16, 32)
    o_ref[...] = out.astype(o_ref.dtype)


def _build_fused_mask(attention_mask, num_heads, neg=NEG_OFF_BLOCK):
    """(B,S) additive mask -> (NH*B*S, NH*B*S) block-diagonal additive mask."""
    B, S = attention_mask.shape
    T = B * S
    dt = attention_mask.dtype
    # batch-block-diagonal (T, T): block b = attention_mask[b] broadcast over queries
    bm = jnp.full((T, T), neg, dt)
    for b in range(B):
        blk = jnp.broadcast_to(attention_mask[b][None, :], (S, S))
        bm = bm.at[b * S:(b + 1) * S, b * S:(b + 1) * S].set(blk)
    # head-block-diagonal (NH*T, NH*T)
    fm = jnp.full((num_heads * T, num_heads * T), neg, dt)
    for h in range(num_heads):
        fm = fm.at[h * T:(h + 1) * T, h * T:(h + 1) * T].set(bm)
    return fm


@jax.jit
def cir_self_attention(hidden_states, attention_mask, wq, wk, wv):
    B, S, H = hidden_states.shape
    # Host-side (jit-fused) weight fusion + transpose and mask construction:
    # kernel sees x @ W_qkv (no .T inside) and a single additive mask.
    w_qkv_t = jnp.concatenate([wq, wk, wv], axis=0).T          # (H, 3H)
    x2d = hidden_states.reshape(B * S, H)
    fused_mask = _build_fused_mask(attention_mask, NUM_HEADS)  # (NH*B*S, NH*B*S)
    T = NUM_HEADS * B * S

    out2d = pl.pallas_call(
        _attn_kernel,
        out_shape=jax.ShapeDtypeStruct((B * S, H), hidden_states.dtype),
        grid=(1,),                                             # single step: whole problem
        in_specs=[
            pl.BlockSpec((B * S, H), lambda i: (0, 0)),
            pl.BlockSpec((T, T), lambda i: (0, 0)),
            pl.BlockSpec((H, 3 * H), lambda i: (0, 0)),
        ],
        out_specs=pl.BlockSpec((B * S, H), lambda i: (0, 0)),
        compiler_params=pltpu.CompilerParams(
            dimension_semantics=("arbitrary",)),
    )(x2d, fused_mask, w_qkv_t)
    return out2d.reshape(B, S, H)


# ------------------------------ reference -----------------------------------
def reference(hidden_states, attention_mask, wq, wk, wv):
    B, S, H = hidden_states.shape

    def proj(x, w):
        return jnp.einsum("bsh,oh->bso", x, w)

    def split_heads(x):
        return x.reshape(B, S, NUM_HEADS, HEAD_SIZE).transpose(0, 2, 1, 3)

    q = split_heads(proj(hidden_states, wq))
    k = split_heads(proj(hidden_states, wk))
    v = split_heads(proj(hidden_states, wv))
    scores = jnp.einsum("bhqd,bhkd->bhqk", q, k) / math.sqrt(HEAD_SIZE)
    scores = scores + attention_mask[:, None, None, :]
    probs = jax.nn.softmax(scores, axis=-1)
    ctx = jnp.einsum("bhqk,bhkd->bhqd", probs, v)
    return ctx.transpose(0, 2, 1, 3).reshape(B, S, ALL_HEAD_SIZE)


# --------------------------------- main --------------------------------------
if __name__ == "__main__":
    key = jax.random.PRNGKey(0)
    k_x, k_m, k_q, k_k, k_v = jax.random.split(key, 5)

    # Deterministic parameter init (kaiming_uniform_-style bound: sqrt(6/fan_in)).
    bound = math.sqrt(6.0 / HIDDEN)
    wq_raw = jax.random.uniform(k_q, (ALL_HEAD_SIZE, HIDDEN), jnp.float32, -bound, bound)
    wk_raw = jax.random.uniform(k_k, (ALL_HEAD_SIZE, HIDDEN), jnp.float32, -bound, bound)
    wv_raw = jax.random.uniform(k_v, (ALL_HEAD_SIZE, HIDDEN), jnp.float32, -bound, bound)

    if CIR:
        wq = trans_to_cir(wq_raw, BLOCK_SIZE)
        wk = trans_to_cir(wk_raw, BLOCK_SIZE)
        wv = trans_to_cir(wv_raw, BLOCK_SIZE)
    else:
        wq, wk, wv = wq_raw, wk_raw, wv_raw

    hidden_states = jax.random.normal(k_x, (BATCH, SEQ, HIDDEN), jnp.float32)
    # BERT-style additive mask: 0 for attend, -10000 for masked positions.
    mask_bits = (jax.random.uniform(k_m, (BATCH, SEQ)) > 0.2).astype(jnp.float32)
    attention_mask = (1.0 - mask_bits) * -10000.0

    out = cir_self_attention(hidden_states, attention_mask, wq, wk, wv)
    out = jax.block_until_ready(out)

    ref = reference(hidden_states, attention_mask, wq, wk, wv)
    # Exact f32 softmax divide (no approx reciprocal) -> comfortably within 2e-3.
    np.testing.assert_allclose(np.asarray(out), np.asarray(ref), rtol=2e-3, atol=2e-3)

    print("KERNEL_OK")
</pallas_src>

<mosaic_0001>
module attributes {stable_mosaic.version = 11 : i64} {
  func.func @_attn_kernel(%arg0: i32, %arg1: memref<16x32xf32, #tpu.memory_space<vmem>>, %arg2: memref<64x64xf32, #tpu.memory_space<vmem>>, %arg3: memref<32x96xf32, #tpu.memory_space<vmem>>, %arg4: memref<16x32xf32, #tpu.memory_space<vmem>>) attributes {dimension_semantics = [#tpu.dimension_semantics<arbitrary>], iteration_bounds = array<i64: 1>, scalar_prefetch = 0 : i64, scratch_operands = 0 : i64, tpu.core_type = #tpu.core_type<tc>, window_params = [{pipeline_mode = #tpu.pipeline_mode<synchronous>, transform_indices = @transform_0, window_bounds = array<i64: 16, 32>}, {pipeline_mode = #tpu.pipeline_mode<synchronous>, transform_indices = @transform_1, window_bounds = array<i64: 64, 64>}, {pipeline_mode = #tpu.pipeline_mode<synchronous>, transform_indices = @transform_2, window_bounds = array<i64: 32, 96>}, {pipeline_mode = #tpu.pipeline_mode<synchronous>, transform_indices = @transform_3, window_bounds = array<i64: 16, 32>}]} {
    %c0 = arith.constant 0 : index
    %c0_0 = arith.constant 0 : index
    %0 = vector.load %arg1[%c0, %c0_0] : memref<16x32xf32, #tpu.memory_space<vmem>>, vector<16x32xf32>
    %c0_1 = arith.constant 0 : index
    %c0_2 = arith.constant 0 : index
    %1 = vector.load %arg3[%c0_1, %c0_2] : memref<32x96xf32, #tpu.memory_space<vmem>>, vector<32x96xf32>
    %c0_3 = arith.constant 0 : index
    %c0_4 = arith.constant 0 : index
    %2 = vector.load %arg2[%c0_3, %c0_4] : memref<64x64xf32, #tpu.memory_space<vmem>>, vector<64x64xf32>
    %cst = arith.constant dense<0.000000e+00> : vector<16x96xf32>
    %3 = tpu.matmul %0, %1, %cst {dimension_numbers = #tpu.dot_dimension_numbers<[1], [0], [0], [1], [0, 0, 1, 1], [], []>} : vector<16x32xf32>, vector<32x96xf32>, vector<16x96xf32> -> vector<16x96xf32>
    %4 = vector.extract_strided_slice %3 {offsets = [0, 0], sizes = [16, 8], strides = [1, 1]} : vector<16x96xf32> to vector<16x8xf32>
    %5 = vector.extract_strided_slice %3 {offsets = [0, 8], sizes = [16, 8], strides = [1, 1]} : vector<16x96xf32> to vector<16x8xf32>
    %6 = vector.extract_strided_slice %3 {offsets = [0, 16], sizes = [16, 8], strides = [1, 1]} : vector<16x96xf32> to vector<16x8xf32>
    %7 = vector.extract_strided_slice %3 {offsets = [0, 24], sizes = [16, 8], strides = [1, 1]} : vector<16x96xf32> to vector<16x8xf32>
    %8 = tpu.concatenate %4, %5, %6, %7 in 0 : vector<16x8xf32>, vector<16x8xf32>, vector<16x8xf32>, vector<16x8xf32> -> vector<64x8xf32>
    %9 = vector.extract_strided_slice %3 {offsets = [0, 32], sizes = [16, 8], strides = [1, 1]} : vector<16x96xf32> to vector<16x8xf32>
    %10 = vector.extract_strided_slice %3 {offsets = [0, 40], sizes = [16, 8], strides = [1, 1]} : vector<16x96xf32> to vector<16x8xf32>
    %11 = vector.extract_strided_slice %3 {offsets = [0, 48], sizes = [16, 8], strides = [1, 1]} : vector<16x96xf32> to vector<16x8xf32>
    %12 = vector.extract_strided_slice %3 {offsets = [0, 56], sizes = [16, 8], strides = [1, 1]} : vector<16x96xf32> to vector<16x8xf32>
    %13 = tpu.concatenate %9, %10, %11, %12 in 0 : vector<16x8xf32>, vector<16x8xf32>, vector<16x8xf32>, vector<16x8xf32> -> vector<64x8xf32>
    %14 = vector.extract_strided_slice %3 {offsets = [0, 64], sizes = [16, 8], strides = [1, 1]} : vector<16x96xf32> to vector<16x8xf32>
    %15 = vector.extract_strided_slice %3 {offsets = [0, 72], sizes = [16, 8], strides = [1, 1]} : vector<16x96xf32> to vector<16x8xf32>
    %16 = vector.extract_strided_slice %3 {offsets = [0, 80], sizes = [16, 8], strides = [1, 1]} : vector<16x96xf32> to vector<16x8xf32>
    %17 = vector.extract_strided_slice %3 {offsets = [0, 88], sizes = [16, 8], strides = [1, 1]} : vector<16x96xf32> to vector<16x8xf32>
    %18 = tpu.concatenate %14, %15, %16, %17 in 0 : vector<16x8xf32>, vector<16x8xf32>, vector<16x8xf32>, vector<16x8xf32> -> vector<64x8xf32>
    %cst_5 = arith.constant dense<0.000000e+00> : vector<64x64xf32>
    %19 = tpu.matmul %8, %13, %cst_5 {dimension_numbers = #tpu.dot_dimension_numbers<[1], [1], [0], [0], [0, 0, 1, 0], [], []>} : vector<64x8xf32>, vector<64x8xf32>, vector<64x64xf32> -> vector<64x64xf32>
    %cst_6 = arith.constant 0.353553385 : f32
    %20 = vector.broadcast %cst_6 : f32 to vector<64x64xf32>
    %21 = arith.mulf %19, %20 : vector<64x64xf32>
    %22 = arith.addf %21, %2 : vector<64x64xf32>
    %cst_7 = arith.constant dense<0xFF800000> : vector<64xf32>
    %23 = vector.multi_reduction <maximumf>, %22, %cst_7 [1] : vector<64x64xf32> to vector<64xf32>
    %24 = vector.shape_cast %23 : vector<64xf32> to vector<64x1xf32>
    %25 = vector.broadcast %24 : vector<64x1xf32> to vector<64x64xf32>
    %26 = arith.subf %22, %25 : vector<64x64xf32>
    %27 = math.exp %26 : vector<64x64xf32>
    %cst_8 = arith.constant dense<0.000000e+00> : vector<64xf32>
    %28 = vector.multi_reduction <add>, %27, %cst_8 [1] : vector<64x64xf32> to vector<64xf32>
    %29 = vector.shape_cast %28 : vector<64xf32> to vector<64x1xf32>
    %30 = vector.broadcast %29 : vector<64x1xf32> to vector<64x64xf32>
    %31 = arith.divf %27, %30 : vector<64x64xf32>
    %cst_9 = arith.constant dense<0.000000e+00> : vector<64x8xf32>
    %32 = tpu.matmul %31, %18, %cst_9 {dimension_numbers = #tpu.dot_dimension_numbers<[1], [0], [0], [1], [0, 0, 1, 1], [], []>} : vector<64x64xf32>, vector<64x8xf32>, vector<64x8xf32> -> vector<64x8xf32>
    %33 = vector.extract_strided_slice %32 {offsets = [0, 0], sizes = [16, 8], strides = [1, 1]} : vector<64x8xf32> to vector<16x8xf32>
    %34 = vector.extract_strided_slice %32 {offsets = [16, 0], sizes = [16, 8], strides = [1, 1]} : vector<64x8xf32> to vector<16x8xf32>
    %35 = vector.extract_strided_slice %32 {offsets = [32, 0], sizes = [16, 8], strides = [1, 1]} : vector<64x8xf32> to vector<16x8xf32>
    %36 = vector.extract_strided_slice %32 {offsets = [48, 0], sizes = [16, 8], strides = [1, 1]} : vector<64x8xf32> to vector<16x8xf32>
    %37 = tpu.concatenate %33, %34, %35, %36 in 1 : vector<16x8xf32>, vector<16x8xf32>, vector<16x8xf32>, vector<16x8xf32> -> vector<16x32xf32>
    %c0_10 = arith.constant 0 : index
    %c0_11 = arith.constant 0 : index
    %38 = vector.load %arg4[%c0_10, %c0_11] : memref<16x32xf32, #tpu.memory_space<vmem>>, vector<16x32xf32>
    tpu.vector_store %arg4[%c0_10, %c0_11], %37 {strides = array<i32>} : memref<16x32xf32, #tpu.memory_space<vmem>>, vector<16x32xf32>,
    return
  }
  func.func @transform_0(%arg0: i32) -> (i32, i32) {
    %c0_i32 = arith.constant 0 : i32
    %c0_i32_0 = arith.constant 0 : i32
    %c0_i32_1 = arith.constant 0 : i32
    return %c0_i32, %c0_i32_0 : i32, i32
  }
  func.func @transform_1(%arg0: i32) -> (i32, i32) {
    %c0_i32 = arith.constant 0 : i32
    %c0_i32_0 = arith.constant 0 : i32
    %c0_i32_1 = arith.constant 0 : i32
    return %c0_i32, %c0_i32_0 : i32, i32
  }
  func.func @transform_2(%arg0: i32) -> (i32, i32) {
    %c0_i32 = arith.constant 0 : i32
    %c0_i32_0 = arith.constant 0 : i32
    %c0_i32_1 = arith.constant 0 : i32
    return %c0_i32, %c0_i32_0 : i32, i32
  }
  func.func @transform_3(%arg0: i32) -> (i32, i32) {
    %c0_i32 = arith.constant 0 : i32
    %c0_i32_0 = arith.constant 0 : i32
    %c0_i32_1 = arith.constant 0 : i32
    return %c0_i32, %c0_i32_0 : i32, i32
  }
}

</mosaic_0001>

<llo_original>
// kernel: cir_self_attention.1
$region0: #{cir_self_attention.1}
  #allocation0 [shape = 'u32[]', space=smem, size = 0x4, offset = 0x4, fixed_abs, tag = 'smem constant byte address 0x4 - core index']
  #allocation1 [shape = 'u32[144,128]{1,0:T(1,128)}', space=vmem, size = 0x12000, scoped, tag = 'internal scratch']
  %s0 = inlined_call_operand.vmem [shape: f32[16,32], index: 0, kind: input, shape index: {}]
  %s1 = inlined_call_operand.vmem [shape: f32[64,64], index: 1, kind: input, shape index: {}]
  %s2 = inlined_call_operand.vmem [shape: f32[32,96], index: 2, kind: input, shape index: {}]
  %s3 = inlined_call_operand.hbm [shape: f32[16,32], index: 3, kind: output, shape index: {}]
  %s4 = sld [smem:[#allocation0]]
  $region22: #{cir_self_attention.1} parent=0
    _
  %s6 = ssub.s32 1, %s4
  %s7 = scalar_select 0, %s6, %s4
  $region1: #{cir_self_attention.1} parent=0
    #allocation2 [shape = 'u8[8192]{0}', space=vmem, size = 0x2000, scoped, tag = 'output window, operand 0, single buffered']
    #allocation3 [shape = 's32[1]{0}', space=sflag, size = 0x4, scoped, tag = 'scoped memory for cir_self_attention.1']
    %8 = vsyncpa [#allocation3], 0
    // Predicated region
    $region2: #{cir_self_attention.1} parent=1 // pred_check
      _
    $region3: #{cir_self_attention.1} parent=1 // pred_check_branch
      %10 = sbr.rel (0) target = $region5
    $region4: #{cir_self_attention.1} parent=1 // pred_region
      _
    $region5: #{cir_self_attention.1} parent=1 // pred_fallthru
      _
    // Predicated region
    $region6: #{cir_self_attention.1} parent=1 // pred_check
      _
    $region7: #{cir_self_attention.1} parent=1 // pred_check_branch
      %12 = sbr.rel (0) target = $region9
    $region8: #{cir_self_attention.1} parent=1 // pred_region
      _
    $region9: #{cir_self_attention.1} parent=1 // pred_fallthru
      _
    // Predicated region
    $region10: #{cir_self_attention.1} parent=1 // pred_check
      _
    $region11: #{cir_self_attention.1} parent=1 // pred_check_branch
      %14 = sbr.rel (0) target = $region13
    $region12: #{cir_self_attention.1} parent=1 // pred_region
      _
    $region13: #{cir_self_attention.1} parent=1 // pred_fallthru
      _
    %v15 = vld [vmem:[%s0] sm:$0xff]
    %v16 = vld [vmem:[%s0 + $0x8] sm:$0xff]
    %v17 = vld [vmem:[%s2] sm:$0xff]
    %v18 = vld [vmem:[%s2 + $0x8] sm:$0xff]
    %v19 = vld [vmem:[%s2 + $0x10] sm:$0xff]
    %v20 = vld [vmem:[%s2 + $0x18] sm:$0xff]
    %v21 = vld [vmem:[%s1] sm:$0xff]
    %v22 = vld [vmem:[%s1 + $0x8] sm:$0xff]
    %v23 = vld [vmem:[%s1 + $0x10] sm:$0xff]
    %v24 = vld [vmem:[%s1 + $0x18] sm:$0xff]
    %v25 = vld [vmem:[%s1 + $0x20] sm:$0xff]
    %v26 = vld [vmem:[%s1 + $0x28] sm:$0xff]
    %v27 = vld [vmem:[%s1 + $0x30] sm:$0xff]
    %v28 = vld [vmem:[%s1 + $0x38] sm:$0xff]
    %vm29 = vcmask 261120
    %v31 = vsel %vm29, %v15, 0
    %v34 = vsel %vm29, %v16, 0
    %36 = vmatprep.subr.mxu0 0.0
    %37 = vmatpush1.msra.mxu0 %v17
    %38 = vmatprep.subr.mxu0 0.0
    %39 = vmatpush1.msra.mxu0 %v18
    %40 = vmatprep.subr.mxu0 0.0
    %41 = vmatpush1.msra.mxu0 %v19
    %42 = vmatprep.subr.mxu0 0.0
    %43 = vmatpush1.msra.mxu0 %v20
    %44 = vmatprep.subr.mxu0 0.0
    %45 = vmatpush1.msra.mxu0 0.0
    %46 = vmatprep.subr.mxu0 0.0
    %47 = vmatpush1.msra.mxu0 0.0
    %48 = vmatprep.subr.mxu0 0.0
    %49 = vmatpush1.msra.mxu0 0.0
    %50 = vmatprep.subr.mxu0 0.0
    %51 = vmatpush1.msra.mxu0 0.0
    %52 = vmatprep.subr.mxu0 0.0
    %53 = vmatpush1.msra.mxu0 0.0
    %54 = vmatprep.subr.mxu0 0.0
    %55 = vmatpush1.msra.mxu0 0.0
    %56 = vmatprep.subr.mxu0 0.0
    %57 = vmatpush1.msra.mxu0 0.0
    %58 = vmatprep.subr.mxu0 0.0
    %59 = vmatpush1.msra.mxu0 0.0
    %60 = vmatprep.subr.mxu0 0.0
    %61 = vmatpush1.msra.mxu0 0.0
    %62 = vmatprep.subr.mxu0 0.0
    %63 = vmatpush1.msra.mxu0 0.0
    %64 = vmatprep.subr.mxu0 0.0
    %65 = vmatpush1.msra.mxu0 0.0
    %66 = vmatprep.subr.mxu0 0.0
    %67 = vmatpush1.msra.mxu0 0.0
    %68 = vmatprep.subr.mxu0 0.0
    %69 = vmatpush1.msra.mxu0 0.0
    %70 = vmatprep.subr.mxu0 0.0
    %71 = vmatpush1.msra.mxu0 0.0
    %72 = vmatprep.subr.mxu0 0.0
    %73 = vmatpush1.msra.mxu0 0.0
    %74 = vmatprep.subr.mxu0 0.0
    %75 = vmatpush1.msra.mxu0 0.0
    %76 = vmatprep.subr.mxu0 0.0
    %77 = vmatpush1.msra.mxu0 0.0
    %78 = vmatprep.subr.mxu0 0.0
    %79 = vmatpush1.msra.mxu0 0.0
    %80 = vmatprep.subr.mxu0 0.0
    %81 = vmatpush1.msra.mxu0 0.0
    %82 = vmatprep.subr.mxu0 0.0
    %83 = vmatpush1.msra.mxu0 0.0
    %84 = vmatprep.subr.mxu0 0.0
    %85 = vmatpush1.msra.mxu0 0.0
    %86 = vmatprep.subr.mxu0 0.0
    %87 = vmatpush1.msra.mxu0 0.0
    %88 = vmatprep.subr.mxu0 0.0
    %89 = vmatpush1.msra.mxu0 0.0
    %90 = vmatprep.subr.mxu0 0.0
    %91 = vmatpush1.msra.mxu0 0.0
    %92 = vmatprep.subr.mxu0 0.0
    %93 = vmatpush1.msra.mxu0 0.0
    %94 = vmatprep.subr.mxu0 0.0
    %95 = vmatpush1.msra.mxu0 0.0
    %96 = vmatprep.subr.mxu0 0.0
    %97 = vmatpush1.msra.mxu0 0.0
    %98 = vmatprep.subr.mxu0 0.0
    %99 = vmatpush1.msra.mxu0 0.0
    %100 = vmatprep.mubr.f32.mxu0 0.0
    %101 = vmatmul.mubr.f32.gmra.mrb[0].mxu0 %v31
    %v102 = vpop.f32.mrb[0].mxu0
    %v103 = vadd.f32 0.0, %v102
    %v104 = vpop.f32.mrb[0].mxu0
    %105 = vmatprep.mubr.f32.mxu0 0.0
    %106 = vmatmul.mubr.f32.gmra.mrb[0].mxu0 %v34
    %v107 = vpop.f32.mrb[0].mxu0
    %v108 = vadd.f32 0.0, %v107
    %v109 = vpop.f32.mrb[0].mxu0
    %110 = vdwg.mxu0
    %113 = vrot.lane.b32.xlu0 %v103, 120
    %v114 = vpop.permute.xlu0 %113
    %115 = vrot.lane.b32.xlu0 %v108, 120
    %v116 = vpop.permute.xlu0 %115
    %117 = vrot.lane.b32.xlu0 %v103, 112
    %v118 = vpop.permute.xlu0 %117
    %119 = vrot.lane.b32.xlu0 %v108, 112
    %v120 = vpop.permute.xlu0 %119
    %121 = vrot.lane.b32.xlu0 %v103, 104
    %v122 = vpop.permute.xlu0 %121
    %123 = vrot.lane.b32.xlu0 %v108, 104
    %v124 = vpop.permute.xlu0 %123
    %125 = vrot.lane.b32.xlu0 %v103, 96
    %v126 = vpop.permute.xlu0 %125
    %127 = vrot.lane.b32.xlu0 %v108, 96
    %v128 = vpop.permute.xlu0 %127
    %129 = vrot.lane.b32.xlu0 %v114, 96
    %v130 = vpop.permute.xlu0 %129
    %131 = vrot.lane.b32.xlu0 %v116, 96
    %v132 = vpop.permute.xlu0 %131
    %133 = vrot.lane.b32.xlu0 %v118, 96
    %v134 = vpop.permute.xlu0 %133
    %135 = vrot.lane.b32.xlu0 %v120, 96
    %v136 = vpop.permute.xlu0 %135
    %137 = vrot.lane.b32.xlu0 %v122, 96
    %v138 = vpop.permute.xlu0 %137
    %139 = vrot.lane.b32.xlu0 %v124, 96
    %v140 = vpop.permute.xlu0 %139
    %vm141 = vcmask 64512
    %v142 = vsel %vm141, %v103, 0
    %v144 = vsel %vm141, %v108, 0
    %v146 = vsel %vm141, %v114, 0
    %v148 = vsel %vm141, %v116, 0
    %v150 = vsel %vm141, %v118, 0
    %v152 = vsel %vm141, %v120, 0
    %v154 = vsel %vm141, %v122, 0
    %v156 = vsel %vm141, %v124, 0
    %v158 = vsel %vm141, %v126, 0
    %v160 = vsel %vm141, %v128, 0
    %v162 = vsel %vm141, %v130, 0
    %v164 = vsel %vm141, %v132, 0
    %v166 = vsel %vm141, %v134, 0
    %v168 = vsel %vm141, %v136, 0
    %v170 = vsel %vm141, %v138, 0
    %v172 = vsel %vm141, %v140, 0
    %174 = vmatprep.subr.mxu0 0.0
    %175 = vmatpush1.xpose.msra.mxu0 %v158
    %176 = vmatprep.subr.mxu0 0.0
    %177 = vmatpush1.xpose.msra.mxu0 %v160
    %178 = vmatprep.subr.mxu0 0.0
    %179 = vmatpush1.xpose.msra.mxu0 %v162
    %180 = vmatprep.subr.mxu0 0.0
    %181 = vmatpush1.xpose.msra.mxu0 %v164
    %182 = vmatprep.subr.mxu0 0.0
    %183 = vmatpush1.xpose.msra.mxu0 %v166
    %184 = vmatprep.subr.mxu0 0.0
    %185 = vmatpush1.xpose.msra.mxu0 %v168
    %186 = vmatprep.subr.mxu0 0.0
    %187 = vmatpush1.xpose.msra.mxu0 %v170
    %188 = vmatprep.subr.mxu0 0.0
    %189 = vmatpush1.xpose.msra.mxu0 %v172
    %190 = vmatprep.subr.mxu0 0.0
    %191 = vmatpush1.xpose.msra.mxu0 0.0
    %192 = vmatprep.subr.mxu0 0.0
    %193 = vmatpush1.xpose.msra.mxu0 0.0
    %194 = vmatprep.subr.mxu0 0.0
    %195 = vmatpush1.xpose.msra.mxu0 0.0
    %196 = vmatprep.subr.mxu0 0.0
    %197 = vmatpush1.xpose.msra.mxu0 0.0
    %198 = vmatprep.subr.mxu0 0.0
    %199 = vmatpush1.xpose.msra.mxu0 0.0
    %200 = vmatprep.subr.mxu0 0.0
    %201 = vmatpush1.xpose.msra.mxu0 0.0
    %202 = vmatprep.subr.mxu0 0.0
    %203 = vmatpush1.xpose.msra.mxu0 0.0
    %204 = vmatprep.subr.mxu0 0.0
    %205 = vmatpush1.xpose.msra.mxu0 0.0
    %206 = vmatprep.subr.mxu0 0.0
    %207 = vmatpush1.xpose.msra.mxu0 0.0
    %208 = vmatprep.subr.mxu0 0.0
    %209 = vmatpush1.xpose.msra.mxu0 0.0
    %210 = vmatprep.subr.mxu0 0.0
    %211 = vmatpush1.xpose.msra.mxu0 0.0
    %212 = vmatprep.subr.mxu0 0.0
    %213 = vmatpush1.xpose.msra.mxu0 0.0
    %214 = vmatprep.subr.mxu0 0.0
    %215 = vmatpush1.xpose.msra.mxu0 0.0
    %216 = vmatprep.subr.mxu0 0.0
    %217 = vmatpush1.xpose.msra.mxu0 0.0
    %218 = vmatprep.subr.mxu0 0.0
    %219 = vmatpush1.xpose.msra.mxu0 0.0
    %220 = vmatprep.subr.mxu0 0.0
    %221 = vmatpush1.xpose.msra.mxu0 0.0
    %222 = vmatprep.subr.mxu0 0.0
    %223 = vmatpush1.xpose.msra.mxu0 0.0
    %224 = vmatprep.subr.mxu0 0.0
    %225 = vmatpush1.xpose.msra.mxu0 0.0
    %226 = vmatprep.subr.mxu0 0.0
    %227 = vmatpush1.xpose.msra.mxu0 0.0
    %228 = vmatprep.subr.mxu0 0.0
    %229 = vmatpush1.xpose.msra.mxu0 0.0
    %230 = vmatprep.subr.mxu0 0.0
    %231 = vmatpush1.xpose.msra.mxu0 0.0
    %232 = vmatprep.subr.mxu0 0.0
    %233 = vmatpush1.xpose.msra.mxu0 0.0
    %234 = vmatprep.subr.mxu0 0.0
    %235 = vmatpush1.xpose.msra.mxu0 0.0
    %236 = vmatprep.subr.mxu0 0.0
    %237 = vmatpush1.xpose.msra.mxu0 0.0
    %238 = vmatprep.mubr.f32.mxu0 0.0
    %239 = vmatmul.mubr.f32.gmra.mrb[0].mxu0 %v142
    %v240 = vpop.f32.mrb[0].mxu0
    %v241 = vadd.f32 0.0, %v240
    %v242 = vpop.f32.mrb[0].mxu0
    %243 = vmatprep.mubr.f32.mxu0 0.0
    %244 = vmatmul.mubr.f32.gmra.mrb[0].mxu0 %v144
    %v245 = vpop.f32.mrb[0].mxu0
    %v246 = vadd.f32 0.0, %v245
    %v247 = vpop.f32.mrb[0].mxu0
    %248 = vmatprep.mubr.f32.mxu0 0.0
    %249 = vmatmul.mubr.f32.gmra.mrb[0].mxu0 %v146
    %v250 = vpop.f32.mrb[0].mxu0
    %v251 = vadd.f32 0.0, %v250
    %v252 = vpop.f32.mrb[0].mxu0
    %253 = vmatprep.mubr.f32.mxu0 0.0
    %254 = vmatmul.mubr.f32.gmra.mrb[0].mxu0 %v148
    %v255 = vpop.f32.mrb[0].mxu0
    %v256 = vadd.f32 0.0, %v255
    %v257 = vpop.f32.mrb[0].mxu0
    %258 = vmatprep.mubr.f32.mxu0 0.0
    %259 = vmatmul.mubr.f32.gmra.mrb[0].mxu0 %v150
    %v260 = vpop.f32.mrb[0].mxu0
    %v261 = vadd.f32 0.0, %v260
    %v262 = vpop.f32.mrb[0].mxu0
    %263 = vmatprep.mubr.f32.mxu0 0.0
    %264 = vmatmul.mubr.f32.gmra.mrb[0].mxu0 %v152
    %v265 = vpop.f32.mrb[0].mxu0
    %v266 = vadd.f32 0.0, %v265
    %v267 = vpop.f32.mrb[0].mxu0
    %268 = vmatprep.mubr.f32.mxu0 0.0
    %269 = vmatmul.mubr.f32.gmra.mrb[0].mxu0 %v154
    %v270 = vpop.f32.mrb[0].mxu0
    %v271 = vadd.f32 0.0, %v270
    %v272 = vpop.f32.mrb[0].mxu0
    %273 = vmatprep.mubr.f32.mxu0 0.0
    %274 = vmatmul.mubr.f32.gmra.mrb[0].mxu0 %v156
    %v275 = vpop.f32.mrb[0].mxu0
    %v276 = vadd.f32 0.0, %v275
    %v277 = vpop.f32.mrb[0].mxu0
    %278 = vdwg.mxu0
    %v279 = vmul.f32 %v241, 0.35355338
    %v280 = vmul.f32 %v246, 0.35355338
    %v281 = vmul.f32 %v251, 0.35355338
    %v282 = vmul.f32 %v256, 0.35355338
    %v283 = vmul.f32 %v261, 0.35355338
    %v284 = vmul.f32 %v266, 0.35355338
    %v285 = vmul.f32 %v271, 0.35355338
    %v286 = vmul.f32 %v276, 0.35355338
    %v287 = vadd.f32 %v279, %v21
    %v288 = vadd.f32 %v280, %v22
    %v289 = vadd.f32 %v281, %v23
    %v290 = vadd.f32 %v282, %v24
    %v291 = vadd.f32 %v283, %v25
    %v292 = vadd.f32 %v284, %v26
    %v293 = vadd.f32 %v285, %v27
    %v294 = vadd.f32 %v286, %v28
    %vm295 = vcmask 523264
    %v296 = vsel %vm295, %v287, -inf
    %297 = vmax.xlane.f32.xlu0 %v296
    %v298 = vpop.xlane.xlu0 %297
    %v299 = vsel %vm295, %v288, -inf
    %300 = vmax.xlane.f32.xlu0 %v299
    %v301 = vpop.xlane.xlu0 %300
    %v302 = vsel %vm295, %v289, -inf
    %303 = vmax.xlane.f32.xlu0 %v302
    %v304 = vpop.xlane.xlu0 %303
    %v305 = vsel %vm295, %v290, -inf
    %306 = vmax.xlane.f32.xlu0 %v305
    %v307 = vpop.xlane.xlu0 %306
    %v308 = vsel %vm295, %v291, -inf
    %309 = vmax.xlane.f32.xlu0 %v308
    %v310 = vpop.xlane.xlu0 %309
    %v311 = vsel %vm295, %v292, -inf
    %312 = vmax.xlane.f32.xlu0 %v311
    %v313 = vpop.xlane.xlu0 %312
    %v314 = vsel %vm295, %v293, -inf
    %315 = vmax.xlane.f32.xlu0 %v314
    %v316 = vpop.xlane.xlu0 %315
    %v317 = vsel %vm295, %v294, -inf
    %318 = vmax.xlane.f32.xlu0 %v317
    %v319 = vpop.xlane.xlu0 %318
    %v320 = vsub.f32 %v287, %v298
    %v321 = vsub.f32 %v288, %v301
    %v322 = vsub.f32 %v289, %v304
    %v323 = vsub.f32 %v290, %v307
    %v324 = vsub.f32 %v291, %v310
    %v325 = vsub.f32 %v292, %v313
    %v326 = vsub.f32 %v293, %v316
    %v327 = vsub.f32 %v294, %v319
    %v328 = vmul.f32 %v320, 1.442695
    %v329 = vpow.pop %v328
    %v330 = vmul.f32 %v321, 1.442695
    %v331 = vpow.pop %v330
    %v332 = vmul.f32 %v322, 1.442695
    %v333 = vpow.pop %v332
    %v334 = vmul.f32 %v323, 1.442695
    %v335 = vpow.pop %v334
    %v336 = vmul.f32 %v324, 1.442695
    %v337 = vpow.pop %v336
    %v338 = vmul.f32 %v325, 1.442695
    %v339 = vpow.pop %v338
    %v340 = vmul.f32 %v326, 1.442695
    %v341 = vpow.pop %v340
    %v342 = vmul.f32 %v327, 1.442695
    %v343 = vpow.pop %v342
    %v344 = vsel %vm295, %v329, 0.0
    %345 = vadd.xlane.f32.xlu0 %v344
    %v346 = vpop.xlane.xlu0 %345
    %v347 = vsel %vm295, %v331, 0.0
    %348 = vadd.xlane.f32.xlu0 %v347
    %v349 = vpop.xlane.xlu0 %348
    %v350 = vsel %vm295, %v333, 0.0
    %351 = vadd.xlane.f32.xlu0 %v350
    %v352 = vpop.xlane.xlu0 %351
    %v353 = vsel %vm295, %v335, 0.0
    %354 = vadd.xlane.f32.xlu0 %v353
    %v355 = vpop.xlane.xlu0 %354
    %v356 = vsel %vm295, %v337, 0.0
    %357 = vadd.xlane.f32.xlu0 %v356
    %v358 = vpop.xlane.xlu0 %357
    %v359 = vsel %vm295, %v339, 0.0
    %360 = vadd.xlane.f32.xlu0 %v359
    %v361 = vpop.xlane.xlu0 %360
    %v362 = vsel %vm295, %v341, 0.0
    %363 = vadd.xlane.f32.xlu0 %v362
    %v364 = vpop.xlane.xlu0 %363
    %v365 = vsel %vm295, %v343, 0.0
    %366 = vadd.xlane.f32.xlu0 %v365
    %v367 = vpop.xlane.xlu0 %366
    %v368 = vrcp.pop %v346
    %v369 = vmul.f32 %v329, %v368
    %v370 = vrcp.pop %v349
    %v371 = vmul.f32 %v331, %v370
    %v372 = vrcp.pop %v352
    %v373 = vmul.f32 %v333, %v372
    %v374 = vrcp.pop %v355
    %v375 = vmul.f32 %v335, %v374
    %v376 = vrcp.pop %v358
    %v377 = vmul.f32 %v337, %v376
    %v378 = vrcp.pop %v361
    %v379 = vmul.f32 %v339, %v378
    %v380 = vrcp.pop %v364
    %v381 = vmul.f32 %v341, %v380
    %v382 = vrcp.pop %v367
    %v383 = vmul.f32 %v343, %v382
    %384 = vrot.lane.b32.xlu0 %v103, 64
    %v385 = vpop.permute.xlu0 %384
    %386 = vrot.lane.b32.xlu0 %v108, 64
    %v387 = vpop.permute.xlu0 %386
    %388 = vrot.lane.b32.xlu0 %v114, 64
    %v389 = vpop.permute.xlu0 %388
    %390 = vrot.lane.b32.xlu0 %v116, 64
    %v391 = vpop.permute.xlu0 %390
    %392 = vrot.lane.b32.xlu0 %v118, 64
    %v393 = vpop.permute.xlu0 %392
    %394 = vrot.lane.b32.xlu0 %v120, 64
    %v395 = vpop.permute.xlu0 %394
    %396 = vrot.lane.b32.xlu0 %v122, 64
    %v397 = vpop.permute.xlu0 %396
    %398 = vrot.lane.b32.xlu0 %v124, 64
    %v399 = vpop.permute.xlu0 %398
    %v409 = vsel %vm295, %v369, 0
    %v412 = vsel %vm295, %v371, 0
    %v415 = vsel %vm295, %v373, 0
    %v418 = vsel %vm295, %v375, 0
    %v421 = vsel %vm295, %v377, 0
    %v424 = vsel %vm295, %v379, 0
    %v427 = vsel %vm295, %v381, 0
    %v430 = vsel %vm295, %v383, 0
    %432 = vmatprep.subr.mxu0 0.0
    %433 = vmatpush1.msra.mxu0 %v385
    %434 = vmatprep.subr.mxu0 0.0
    %435 = vmatpush1.msra.mxu0 %v387
    %436 = vmatprep.subr.mxu0 0.0
    %437 = vmatpush1.msra.mxu0 %v389
    %438 = vmatprep.subr.mxu0 0.0
    %439 = vmatpush1.msra.mxu0 %v391
    %440 = vmatprep.subr.mxu0 0.0
    %441 = vmatpush1.msra.mxu0 %v393
    %442 = vmatprep.subr.mxu0 0.0
    %443 = vmatpush1.msra.mxu0 %v395
    %444 = vmatprep.subr.mxu0 0.0
    %445 = vmatpush1.msra.mxu0 %v397
    %446 = vmatprep.subr.mxu0 0.0
    %447 = vmatpush1.msra.mxu0 %v399
    %448 = vmatprep.subr.mxu0 0.0
    %449 = vmatpush1.msra.mxu0 0.0
    %450 = vmatprep.subr.mxu0 0.0
    %451 = vmatpush1.msra.mxu0 0.0
    %452 = vmatprep.subr.mxu0 0.0
    %453 = vmatpush1.msra.mxu0 0.0
    %454 = vmatprep.subr.mxu0 0.0
    %455 = vmatpush1.msra.mxu0 0.0
    %456 = vmatprep.subr.mxu0 0.0
    %457 = vmatpush1.msra.mxu0 0.0
    %458 = vmatprep.subr.mxu0 0.0
    %459 = vmatpush1.msra.mxu0 0.0
    %460 = vmatprep.subr.mxu0 0.0
    %461 = vmatpush1.msra.mxu0 0.0
    %462 = vmatprep.subr.mxu0 0.0
    %463 = vmatpush1.msra.mxu0 0.0
    %464 = vmatprep.subr.mxu0 0.0
    %465 = vmatpush1.msra.mxu0 0.0
    %466 = vmatprep.subr.mxu0 0.0
    %467 = vmatpush1.msra.mxu0 0.0
    %468 = vmatprep.subr.mxu0 0.0
    %469 = vmatpush1.msra.mxu0 0.0
    %470 = vmatprep.subr.mxu0 0.0
    %471 = vmatpush1.msra.mxu0 0.0
    %472 = vmatprep.subr.mxu0 0.0
    %473 = vmatpush1.msra.mxu0 0.0
    %474 = vmatprep.subr.mxu0 0.0
    %475 = vmatpush1.msra.mxu0 0.0
    %476 = vmatprep.subr.mxu0 0.0
    %477 = vmatpush1.msra.mxu0 0.0
    %478 = vmatprep.subr.mxu0 0.0
    %479 = vmatpush1.msra.mxu0 0.0
    %480 = vmatprep.subr.mxu0 0.0
    %481 = vmatpush1.msra.mxu0 0.0
    %482 = vmatprep.subr.mxu0 0.0
    %483 = vmatpush1.msra.mxu0 0.0
    %484 = vmatprep.subr.mxu0 0.0
    %485 = vmatpush1.msra.mxu0 0.0
    %486 = vmatprep.subr.mxu0 0.0
    %487 = vmatpush1.msra.mxu0 0.0
    %488 = vmatprep.subr.mxu0 0.0
    %489 = vmatpush1.msra.mxu0 0.0
    %490 = vmatprep.subr.mxu0 0.0
    %491 = vmatpush1.msra.mxu0 0.0
    %492 = vmatprep.subr.mxu0 0.0
    %493 = vmatpush1.msra.mxu0 0.0
    %494 = vmatprep.subr.mxu0 0.0
    %495 = vmatpush1.msra.mxu0 0.0
    %496 = vmatprep.mubr.f32.mxu0 0.0
    %497 = vmatmul.mubr.f32.gmra.mrb[0].mxu0 %v409
    %v498 = vpop.f32.mrb[0].mxu0
    %v499 = vadd.f32 0.0, %v498
    %v500 = vpop.f32.mrb[0].mxu0
    %501 = vmatprep.mubr.f32.mxu0 0.0
    %502 = vmatmul.mubr.f32.gmra.mrb[0].mxu0 %v412
    %v503 = vpop.f32.mrb[0].mxu0
    %v504 = vadd.f32 0.0, %v503
    %v505 = vpop.f32.mrb[0].mxu0
    %506 = vmatprep.mubr.f32.mxu0 0.0
    %507 = vmatmul.mubr.f32.gmra.mrb[0].mxu0 %v415
    %v508 = vpop.f32.mrb[0].mxu0
    %v509 = vadd.f32 0.0, %v508
    %v510 = vpop.f32.mrb[0].mxu0
    %511 = vmatprep.mubr.f32.mxu0 0.0
    %512 = vmatmul.mubr.f32.gmra.mrb[0].mxu0 %v418
    %v513 = vpop.f32.mrb[0].mxu0
    %v514 = vadd.f32 0.0, %v513
    %v515 = vpop.f32.mrb[0].mxu0
    %516 = vmatprep.mubr.f32.mxu0 0.0
    %517 = vmatmul.mubr.f32.gmra.mrb[0].mxu0 %v421
    %v518 = vpop.f32.mrb[0].mxu0
    %v519 = vadd.f32 0.0, %v518
    %v520 = vpop.f32.mrb[0].mxu0
    %521 = vmatprep.mubr.f32.mxu0 0.0
    %522 = vmatmul.mubr.f32.gmra.mrb[0].mxu0 %v424
    %v523 = vpop.f32.mrb[0].mxu0
    %v524 = vadd.f32 0.0, %v523
    %v525 = vpop.f32.mrb[0].mxu0
    %526 = vmatprep.mubr.f32.mxu0 0.0
    %527 = vmatmul.mubr.f32.gmra.mrb[0].mxu0 %v427
    %v528 = vpop.f32.mrb[0].mxu0
    %v529 = vadd.f32 0.0, %v528
    %v530 = vpop.f32.mrb[0].mxu0
    %531 = vmatprep.mubr.f32.mxu0 0.0
    %532 = vmatmul.mubr.f32.gmra.mrb[0].mxu0 %v430
    %v533 = vpop.f32.mrb[0].mxu0
    %v534 = vadd.f32 0.0, %v533
    %v535 = vpop.f32.mrb[0].mxu0
    %536 = vdwg.mxu0
    %539 = vrot.lane.b32.xlu0 %v509, 8
    %v540 = vpop.permute.xlu0 %539
    %541 = vrot.lane.b32.xlu0 %v514, 8
    %v542 = vpop.permute.xlu0 %541
    %547 = vrot.lane.b32.xlu0 %v519, 16
    %v548 = vpop.permute.xlu0 %547
    %549 = vrot.lane.b32.xlu0 %v524, 16
    %v550 = vpop.permute.xlu0 %549
    %555 = vrot.lane.b32.xlu0 %v529, 24
    %v556 = vpop.permute.xlu0 %555
    %557 = vrot.lane.b32.xlu0 %v534, 24
    %v558 = vpop.permute.xlu0 %557
    %v561 = vsel %vm141, %v499, %v540
    %v562 = vsel %vm141, %v504, %v542
    %vm563 = vcmask 130048
    %v564 = vsel %vm563, %v561, %v548
    %v565 = vsel %vm563, %v562, %v550
    %vm566 = vcmask 195584
    %v567 = vsel %vm566, %v564, %v556
    %v568 = vsel %vm566, %v565, %v558
    %569 = vst.msk [vmem:[#allocation2] sm:$0xff] %vm29, %v567
    %570 = vst.msk [vmem:[#allocation2 + $0x8] sm:$0xff] %vm29, %v568
    // Predicated region
    $region14: #{cir_self_attention.1} parent=1 // pred_check
      _
    $region15: #{cir_self_attention.1} parent=1 // pred_check_branch
      %572 = sbr.rel (0) target = $region17
    $region16: #{cir_self_attention.1} parent=1 // pred_region
      %s574 = ssub.s32 256, 256
      %575 = vsyncadd [#allocation3], %s574
      %s576 = sshll.u32 [#allocation2], 4
      %s577 = int_to_ptr.vmem [resolvable:$true] %s576
      %582 = dma.vmem_to_hbm [thread:$0]  %s577, 256, %s3, [#allocation3], 128, 128, 8
    $region17: #{cir_self_attention.1} parent=1 // pred_fallthru
      _
    // Predicated region
    $region18: #{cir_self_attention.1} parent=1 // pred_check
      _
    $region19: #{cir_self_attention.1} parent=1 // pred_check_branch
      %584 = sbr.rel (0) target = $region21
    $region20: #{cir_self_attention.1} parent=1 // pred_region
      %585 = dma.done [#allocation3], 256
    $region21: #{cir_self_attention.1} parent=1 // pred_fallthru
      _
    %586 = vsyncpa [#allocation3], 1

</llo_original>
